<compile_context>
chip_gen: v7x
topology: tpu7x:2x2x1
jax: 0.10.0
libtpu: 0.0.40
codegen_flags: <defaults>
</compile_context>

<pallas_src>
import jax
import jax.numpy as jnp
from jax.experimental import pallas as pl
from jax.experimental.pallas import tpu as pltpu


def _icm_kernel(x_ref, w_s1_ref, b_s1_ref, w_fm1_ref, b_fm1_ref,
                w_fm2_ref, b_fm2_ref, loss_ref):
    fm_k = w_fm1_ref.shape[0]        # feat + act_dim, padded up to a multiple of 128
    feat = w_fm2_ref.shape[1]

    # Stage 1: one lane-packed matmul produces
    #   lanes [0, fm_k)         = [obs_feat | actions | 0-pad]   (forward-model input)
    #   lanes [fm_k, fm_k+feat) = next_obs_feat
    x = x_ref[...]                                                  # (TM, 2*obs+act) bf16
    s1 = (jnp.dot(x, w_s1_ref[...], preferred_element_type=jnp.float32)
          + b_s1_ref[...])                                          # (TM, fm_k+feat) f32
    fm_in = s1[:, :fm_k].astype(jnp.bfloat16)                       # lane-aligned at 0
    nobs_feat = s1[:, fm_k:]                                        # vreg-aligned (fm_k % 128 == 0)

    # Forward model: Linear -> ReLU -> Linear, f32 accumulation on the MXU.
    h = (jnp.dot(fm_in, w_fm1_ref[...], preferred_element_type=jnp.float32)
         + b_fm1_ref[...])
    h = jnp.maximum(h, 0.0)
    pred = (jnp.dot(h.astype(jnp.bfloat16), w_fm2_ref[...],
                    preferred_element_type=jnp.float32)
            + b_fm2_ref[...])                                       # (TM, feat) f32

    # Per-row MSE, all in f32.  Row means go through the MXU with d2 streamed
    # as the LHS (no transpose of the (TM, feat) operand); only the tiny
    # (TM, 8) partial is transposed on the XLU to give a lane-dense loss row.
    d = pred - nobs_feat
    d2 = d * d                                                      # f32
    mean_w = jnp.full((feat, 8), 1.0 / feat, dtype=jnp.float32)
    part = jnp.dot(d2, mean_w, preferred_element_type=jnp.float32)  # (TM, 8); cols identical
    loss_ref[...] = jnp.transpose(part, (1, 0))[0:1, :]             # (1, TM)

    # TODO(synk): the inverse-model loss, .backward() and the two Adam.step()
    # calls are training-time side effects with no effect on the returned
    # value; they are not representable in a forward Pallas kernel.


def _pick_block_rows(batch, *, target_steps=8, max_rows=2048):
    """~target_steps grid steps (>=4 per TensorCore on v7x, >=8 on v5e/v6e),
    TM a multiple of 128, capped so VMEM stays tiny even for huge batches."""
    rows = (batch // target_steps) // 128 * 128
    return int(max(128, min(max_rows, rows)))


def icm_forward(obs, next_obs, actions, params, *, block_rows=None):
    """obs/next_obs: (B, obs_dim) f32, actions: (B, action_dim) f32 -> icm_loss (B,) f32."""
    B, obs_dim = obs.shape
    act_dim = actions.shape[1]
    feat = params["w_enc"].shape[1]
    hid = params["w1"].shape[1]

    d_total = 2 * obs_dim + act_dim             # packed input width
    fm_k = -(-(feat + act_dim) // 128) * 128    # forward-model K, padded to a lane multiple
    n1 = fm_k + feat                            # stage-1 output lanes

    tm = _pick_block_rows(B) if block_rows is None else int(block_rows)
    assert tm % 128 == 0, "block_rows must be a multiple of 128 (lane-dense loss row)"
    n_tiles = -(-B // tm)
    B_pad = n_tiles * tm

    # --- Inputs: ONE packed bf16 buffer (single fusible concat+cast+pad),
    # read through ONE BlockSpec per grid step.
    packed = jnp.concatenate([obs, next_obs, actions], axis=1).astype(jnp.bfloat16)
    if B_pad != B:
        packed = jnp.pad(packed, ((0, B_pad - B), (0, 0)))
    # Note: padded tail rows produce garbage loss values that are sliced off
    # below; the (1, B_pad) buffer must never be consumed unsliced.

    # --- Weights: tiny, assembled once per call into the lane-packed layout.
    w_enc = params["w_enc"].astype(jnp.float32)
    w_s1 = jnp.zeros((d_total, n1), jnp.float32)
    w_s1 = w_s1.at[:obs_dim, :feat].set(w_enc)                       # obs      -> obs_feat
    w_s1 = w_s1.at[obs_dim:2 * obs_dim, fm_k:].set(w_enc)            # next_obs -> next_obs_feat
    w_s1 = w_s1.at[2 * obs_dim:, feat:feat + act_dim].set(           # actions pass-through
        jnp.eye(act_dim, dtype=jnp.float32))
    w_s1 = w_s1.astype(jnp.bfloat16)

    b_enc = params["b_enc"].astype(jnp.float32)
    b_s1 = jnp.zeros((1, n1), jnp.float32)
    b_s1 = b_s1.at[0, :feat].set(b_enc)
    b_s1 = b_s1.at[0, fm_k:].set(b_enc)

    w_fm1 = jnp.zeros((fm_k, hid), jnp.float32)
    w_fm1 = w_fm1.at[:feat + act_dim, :].set(params["w1"].astype(jnp.float32))
    w_fm1 = w_fm1.astype(jnp.bfloat16)
    b_fm1 = params["b1"].reshape(1, hid).astype(jnp.float32)
    w_fm2 = params["w2"].astype(jnp.bfloat16)
    b_fm2 = params["b2"].reshape(1, feat).astype(jnp.float32)

    # --- Cost / VMEM bookkeeping (derived from TM rather than hardcoded).
    flops = 2 * B_pad * (d_total * n1 + fm_k * hid + hid * feat + feat * 8)
    bytes_accessed = (B_pad * d_total * 2 + B_pad * 4
                      + (d_total * n1 + fm_k * hid + hid * feat) * 2
                      + (n1 + hid + feat) * 4)
    weight_bytes = ((d_total * n1 + fm_k * hid + hid * feat) * 2
                    + (n1 + hid + feat) * 4)
    per_row_bytes = (2 * d_total * 2            # packed bf16 input, double-buffered
                     + n1 * 4 + fm_k * 2        # stage-1 f32 + bf16 fm input
                     + hid * 6                  # hidden f32 + bf16
                     + feat * 12                # pred / next_obs_feat / d2 (f32)
                     + 8 * 4 + 2 * 4)           # row-sum partials + loss row (dbl-buffered)
    vmem_limit = int(min(64 << 20,
                         max(8 << 20, 2 * (tm * per_row_bytes + 2 * weight_bytes))))

    resident = lambda r, c: pl.BlockSpec((r, c), lambda i: (0, 0))

    loss = pl.pallas_call(
        _icm_kernel,
        out_shape=jax.ShapeDtypeStruct((1, B_pad), jnp.float32),
        grid=(n_tiles,),
        in_specs=[
            pl.BlockSpec((tm, d_total), lambda i: (i, 0)),   # packed [obs|next_obs|actions]
            resident(d_total, n1),                           # stage-1 lane-packed weights
            resident(1, n1),                                 # stage-1 bias
            resident(fm_k, hid),                             # forward-model W1 (row-padded)
            resident(1, hid),                                # forward-model b1
            resident(hid, feat),                             # forward-model W2
            resident(1, feat),                               # forward-model b2
        ],
        out_specs=pl.BlockSpec((1, tm), lambda i: (0, i)),   # lane-dense loss row
        compiler_params=pltpu.CompilerParams(
            dimension_semantics=("parallel",),
            vmem_limit_bytes=vmem_limit),
        cost_estimate=pl.CostEstimate(flops=flops, transcendentals=0,
                                      bytes_accessed=bytes_accessed),
    )(packed, w_s1, b_s1, w_fm1, b_fm1, w_fm2, b_fm2)
    return loss[0, :B]


def init_params(key, obs_dim, action_dim, feature_dim, hidden_dim):
    """Deterministic synthetic params, PyTorch-Linear-like uniform init.
    Weights are stored as [in, out] (transposed relative to nn.Linear)."""
    ks = jax.random.split(key, 6)

    def lin(kw, kb, fan_in, fan_out):
        bound = 1.0 / jnp.sqrt(fan_in)
        w = jax.random.uniform(kw, (fan_in, fan_out), jnp.float32, -bound, bound)
        b = jax.random.uniform(kb, (fan_out,), jnp.float32, -bound, bound)
        return w, b

    w_enc, b_enc = lin(ks[0], ks[1], obs_dim, feature_dim)
    w1, b1 = lin(ks[2], ks[3], feature_dim + action_dim, hidden_dim)
    w2, b2 = lin(ks[4], ks[5], hidden_dim, feature_dim)
    return dict(w_enc=w_enc, b_enc=b_enc, w1=w1, b1=b1, w2=w2, b2=b2)


def _reference(obs, next_obs, actions, p):
    """Pure-JAX reference mirroring the kernel's bf16 casts (f32 accumulation)."""
    hi = jax.lax.Precision.HIGHEST
    bf = lambda a: a.astype(jnp.bfloat16).astype(jnp.float32)
    w_enc, w1, w2 = bf(p["w_enc"]), bf(p["w1"]), bf(p["w2"])
    o, no, a = bf(obs), bf(next_obs), bf(actions)
    of = jnp.dot(o, w_enc, precision=hi) + p["b_enc"]
    nf = jnp.dot(no, w_enc, precision=hi) + p["b_enc"]
    fm_in = bf(jnp.concatenate([of, a], axis=1))
    h = jnp.maximum(jnp.dot(fm_in, w1, precision=hi) + p["b1"], 0.0)
    pred = jnp.dot(bf(h), w2, precision=hi) + p["b2"]
    return jnp.mean((pred - nf) ** 2, axis=-1)


if __name__ == "__main__":
    # Small shapes consistent with the module's forward: flat (M*N, D) inputs.
    B, obs_dim, action_dim = 1000, 32, 8
    feature_dim, hidden_dim = 64, 32

    key = jax.random.PRNGKey(0)
    k_obs, k_nobs, k_act, k_par = jax.random.split(key, 4)
    obs = jax.random.normal(k_obs, (B, obs_dim), jnp.float32)
    next_obs = jax.random.normal(k_nobs, (B, obs_dim), jnp.float32)
    actions = jax.random.normal(k_act, (B, action_dim), jnp.float32)

    params = init_params(k_par, obs_dim, action_dim, feature_dim, hidden_dim)

    icm_loss = jax.jit(icm_forward)(obs, next_obs, actions, params)
    jax.block_until_ready(icm_loss)

    ref = _reference(obs, next_obs, actions, params)
    assert icm_loss.shape == (B,)
    max_err = float(jnp.max(jnp.abs(icm_loss - ref)))
    assert jnp.allclose(icm_loss, ref, rtol=1e-3, atol=1e-4), max_err

    print("KERNEL_OK")
</pallas_src>

<mosaic_0001>
module attributes {stable_mosaic.version = 11 : i64} {
  func.func @_icm_kernel(%arg0: i32, %arg1: memref<128x72xbf16, #tpu.memory_space<vmem>>, %arg2: memref<72x192xbf16, #tpu.memory_space<vmem>>, %arg3: memref<1x192xf32, #tpu.memory_space<vmem>>, %arg4: memref<128x32xbf16, #tpu.memory_space<vmem>>, %arg5: memref<1x32xf32, #tpu.memory_space<vmem>>, %arg6: memref<32x64xbf16, #tpu.memory_space<vmem>>, %arg7: memref<1x64xf32, #tpu.memory_space<vmem>>, %arg8: memref<1x128xf32, #tpu.memory_space<vmem>>) attributes {dimension_semantics = [#tpu.dimension_semantics<parallel>], iteration_bounds = array<i64: 8>, scalar_prefetch = 0 : i64, scratch_operands = 0 : i64, tpu.core_type = #tpu.core_type<tc>, window_params = [{transform_indices = @transform_0, window_bounds = array<i64: 128, 72>}, {pipeline_mode = #tpu.pipeline_mode<synchronous>, transform_indices = @transform_1, window_bounds = array<i64: 72, 192>}, {pipeline_mode = #tpu.pipeline_mode<synchronous>, transform_indices = @transform_2, window_bounds = array<i64: 1, 192>}, {pipeline_mode = #tpu.pipeline_mode<synchronous>, transform_indices = @transform_3, window_bounds = array<i64: 128, 32>}, {pipeline_mode = #tpu.pipeline_mode<synchronous>, transform_indices = @transform_4, window_bounds = array<i64: 1, 32>}, {pipeline_mode = #tpu.pipeline_mode<synchronous>, transform_indices = @transform_5, window_bounds = array<i64: 32, 64>}, {pipeline_mode = #tpu.pipeline_mode<synchronous>, transform_indices = @transform_6, window_bounds = array<i64: 1, 64>}, {transform_indices = @transform_7, window_bounds = array<i64: 1, 128>}]} {
    %c0 = arith.constant 0 : index
    %c0_0 = arith.constant 0 : index
    %0 = vector.load %arg1[%c0, %c0_0] : memref<128x72xbf16, #tpu.memory_space<vmem>>, vector<128x72xbf16>
    %c0_1 = arith.constant 0 : index
    %c0_2 = arith.constant 0 : index
    %1 = vector.load %arg2[%c0_1, %c0_2] : memref<72x192xbf16, #tpu.memory_space<vmem>>, vector<72x192xbf16>
    %cst = arith.constant dense<0.000000e+00> : vector<128x192xf32>
    %2 = tpu.matmul %0, %1, %cst {dimension_numbers = #tpu.dot_dimension_numbers<[1], [0], [0], [1], [0, 0, 1, 1], [], []>} : vector<128x72xbf16>, vector<72x192xbf16>, vector<128x192xf32> -> vector<128x192xf32>
    %c0_3 = arith.constant 0 : index
    %c0_4 = arith.constant 0 : index
    %3 = vector.load %arg3[%c0_3, %c0_4] : memref<1x192xf32, #tpu.memory_space<vmem>>, vector<1x192xf32>
    %4 = vector.broadcast %3 : vector<1x192xf32> to vector<128x192xf32>
    %5 = arith.addf %2, %4 : vector<128x192xf32>
    %6 = vector.extract_strided_slice %5 {offsets = [0, 0], sizes = [128, 128], strides = [1, 1]} : vector<128x192xf32> to vector<128x128xf32>
    %7 = arith.truncf %6 : vector<128x128xf32> to vector<128x128xbf16>
    %8 = vector.extract_strided_slice %5 {offsets = [0, 128], sizes = [128, 64], strides = [1, 1]} : vector<128x192xf32> to vector<128x64xf32>
    %c0_5 = arith.constant 0 : index
    %c0_6 = arith.constant 0 : index
    %9 = vector.load %arg4[%c0_5, %c0_6] : memref<128x32xbf16, #tpu.memory_space<vmem>>, vector<128x32xbf16>
    %cst_7 = arith.constant dense<0.000000e+00> : vector<128x32xf32>
    %10 = tpu.matmul %7, %9, %cst_7 {dimension_numbers = #tpu.dot_dimension_numbers<[1], [0], [0], [1], [0, 0, 1, 1], [], []>} : vector<128x128xbf16>, vector<128x32xbf16>, vector<128x32xf32> -> vector<128x32xf32>
    %c0_8 = arith.constant 0 : index
    %c0_9 = arith.constant 0 : index
    %11 = vector.load %arg5[%c0_8, %c0_9] : memref<1x32xf32, #tpu.memory_space<vmem>>, vector<1x32xf32>
    %12 = vector.broadcast %11 : vector<1x32xf32> to vector<128x32xf32>
    %13 = arith.addf %10, %12 : vector<128x32xf32>
    %cst_10 = arith.constant 0.000000e+00 : f32
    %14 = vector.broadcast %cst_10 : f32 to vector<128x32xf32>
    %15 = arith.maximumf %13, %14 : vector<128x32xf32>
    %16 = arith.truncf %15 : vector<128x32xf32> to vector<128x32xbf16>
    %c0_11 = arith.constant 0 : index
    %c0_12 = arith.constant 0 : index
    %17 = vector.load %arg6[%c0_11, %c0_12] : memref<32x64xbf16, #tpu.memory_space<vmem>>, vector<32x64xbf16>
    %cst_13 = arith.constant dense<0.000000e+00> : vector<128x64xf32>
    %18 = tpu.matmul %16, %17, %cst_13 {dimension_numbers = #tpu.dot_dimension_numbers<[1], [0], [0], [1], [0, 0, 1, 1], [], []>} : vector<128x32xbf16>, vector<32x64xbf16>, vector<128x64xf32> -> vector<128x64xf32>
    %c0_14 = arith.constant 0 : index
    %c0_15 = arith.constant 0 : index
    %19 = vector.load %arg7[%c0_14, %c0_15] : memref<1x64xf32, #tpu.memory_space<vmem>>, vector<1x64xf32>
    %20 = vector.broadcast %19 : vector<1x64xf32> to vector<128x64xf32>
    %21 = arith.addf %18, %20 : vector<128x64xf32>
    %22 = arith.subf %21, %8 : vector<128x64xf32>
    %23 = arith.mulf %22, %22 : vector<128x64xf32>
    %cst_16 = arith.constant 1.562500e-02 : f32
    %24 = vector.broadcast %cst_16 : f32 to vector<64x8xf32>
    %cst_17 = arith.constant dense<0.000000e+00> : vector<128x8xf32>
    %25 = tpu.matmul %23, %24, %cst_17 {dimension_numbers = #tpu.dot_dimension_numbers<[1], [0], [0], [1], [0, 0, 1, 1], [], []>} : vector<128x64xf32>, vector<64x8xf32>, vector<128x8xf32> -> vector<128x8xf32>
    %26 = tpu.transpose %25, [1, 0] : vector<128x8xf32> -> vector<8x128xf32>
    %27 = vector.extract_strided_slice %26 {offsets = [0, 0], sizes = [1, 128], strides = [1, 1]} : vector<8x128xf32> to vector<1x128xf32>
    %c0_18 = arith.constant 0 : index
    %c0_19 = arith.constant 0 : index
    %28 = vector.load %arg8[%c0_18, %c0_19] : memref<1x128xf32, #tpu.memory_space<vmem>>, vector<1x128xf32>
    tpu.vector_store %arg8[%c0_18, %c0_19], %27 {strides = array<i32>} : memref<1x128xf32, #tpu.memory_space<vmem>>, vector<1x128xf32>,
    return
  }
  func.func @transform_0(%arg0: i32) -> (i32, i32) {
    %c0_i32 = arith.constant 0 : i32
    %c0_i32_0 = arith.constant 0 : i32
    return %arg0, %c0_i32 : i32, i32
  }
  func.func @transform_1(%arg0: i32) -> (i32, i32) {
    %c0_i32 = arith.constant 0 : i32
    %c0_i32_0 = arith.constant 0 : i32
    %c0_i32_1 = arith.constant 0 : i32
    return %c0_i32, %c0_i32_0 : i32, i32
  }
  func.func @transform_2(%arg0: i32) -> (i32, i32) {
    %c0_i32 = arith.constant 0 : i32
    %c0_i32_0 = arith.constant 0 : i32
    %c0_i32_1 = arith.constant 0 : i32
    return %c0_i32, %c0_i32_0 : i32, i32
  }
  func.func @transform_3(%arg0: i32) -> (i32, i32) {
    %c0_i32 = arith.constant 0 : i32
    %c0_i32_0 = arith.constant 0 : i32
    %c0_i32_1 = arith.constant 0 : i32
    return %c0_i32, %c0_i32_0 : i32, i32
  }
  func.func @transform_4(%arg0: i32) -> (i32, i32) {
    %c0_i32 = arith.constant 0 : i32
    %c0_i32_0 = arith.constant 0 : i32
    %c0_i32_1 = arith.constant 0 : i32
    return %c0_i32, %c0_i32_0 : i32, i32
  }
  func.func @transform_5(%arg0: i32) -> (i32, i32) {
    %c0_i32 = arith.constant 0 : i32
    %c0_i32_0 = arith.constant 0 : i32
    %c0_i32_1 = arith.constant 0 : i32
    return %c0_i32, %c0_i32_0 : i32, i32
  }
  func.func @transform_6(%arg0: i32) -> (i32, i32) {
    %c0_i32 = arith.constant 0 : i32
    %c0_i32_0 = arith.constant 0 : i32
    %c0_i32_1 = arith.constant 0 : i32
    return %c0_i32, %c0_i32_0 : i32, i32
  }
  func.func @transform_7(%arg0: i32) -> (i32, i32) {
    %c0_i32 = arith.constant 0 : i32
    %c0_i32_0 = arith.constant 0 : i32
    return %c0_i32, %arg0 : i32, i32
  }
}

</mosaic_0001>

<llo_original>
// kernel: icm_forward.1
$region0: #{icm_forward.1}
  #allocation0 [shape = 'u32[]', space=smem, size = 0x4, offset = 0x4, fixed_abs, tag = 'smem constant byte address 0x4 - core index']
  #allocation1 [shape = 'u32[144,128]{1,0:T(1,128)}', space=vmem, size = 0x12000, scoped, tag = 'internal scratch']
  %s0 = inlined_call_operand.vmem [shape: bf16[1024,72], index: 0, kind: input, shape index: {}]
  %s1 = inlined_call_operand.vmem [shape: bf16[72,192], index: 1, kind: input, shape index: {}]
  %s2 = inlined_call_operand.vmem [shape: f32[1,192], index: 2, kind: input, shape index: {}]
  %s3 = inlined_call_operand.vmem [shape: bf16[128,32], index: 3, kind: input, shape index: {}]
  %s4 = inlined_call_operand.vmem [shape: f32[1,32], index: 4, kind: input, shape index: {}]
  %s5 = inlined_call_operand.vmem [shape: bf16[32,64], index: 5, kind: input, shape index: {}]
  %s6 = inlined_call_operand.vmem [shape: f32[1,64], index: 6, kind: input, shape index: {}]
  %s7 = inlined_call_operand.hbm [shape: f32[1,1024], index: 7, kind: output, shape index: {}]
  %s8 = sld [smem:[#allocation0]]
  $region61: #{icm_forward.1} parent=0
    _
  %s10 = ssub.s32 1, %s8
  %s11 = scalar_select 0, %s10, %s8
  $region1: #{icm_forward.1} parent=0
    #allocation2 [shape = 'u8[1024]{0}', space=vmem, size = 0x400, scoped, tag = 'output window, operand 0']
    #allocation3 [shape = 's32[2]{0}', space=sflag, size = 0x8, scoped, tag = 'scoped memory for icm_forward.1']
    %12 = vsyncpa [#allocation3], 0
    %s13 = scalar_lea.sflag [#allocation3], 1
    %14 = vsyncpa %s13, 0
    loop: start=0, step=1, limit=10
    $region2: #{icm_forward.1} parent=1 // loop_pre_header
      _
    $region3: #{icm_forward.1} parent=1 // loop_header
      %s16 = sphi 0, %s20
      %p17 = scmp.ge.s32.totalorder %s16, 10
      %s26 = sphi 0, %s28
      %s29 = sphi 0, %s26
      %s30 = sphi 0, %s29
      %s46 = sphi 0, %s30
      %s50 = sphi 0, %s50
      %s52 = sphi 0, %s50
      %s53 = sphi 0, %s52
      %s67 = sphi 0, %s53
      %s71 = sphi 0, %s71
      %s73 = sphi 0, %s71
      %s74 = sphi 0, %s73
      %s88 = sphi 0, %s74
      %s92 = sphi 0, %s92
      %s94 = sphi 0, %s92
      %s95 = sphi 0, %s94
      %s109 = sphi 0, %s95
      %s113 = sphi 0, %s113
      %s115 = sphi 0, %s113
      %s116 = sphi 0, %s115
      %s130 = sphi 0, %s116
      %s134 = sphi 0, %s134
      %s136 = sphi 0, %s134
      %s137 = sphi 0, %s136
      %s151 = sphi 0, %s137
      %s155 = sphi 0, %s155
      %s157 = sphi 0, %s155
      %s158 = sphi 0, %s157
      %s172 = sphi 0, %s158
      %s178 = sphi 0, %s180
      %s181 = sphi 0, %s178
      %s182 = sphi 0, %s181
      %s198 = sphi 0, %s182
    $region4: #{icm_forward.1} parent=1 // loop_header_branch
      %19 = sbr.rel (%p17) target = $region8
    $region5: #{icm_forward.1} parent=1 // loop_body
      %s21 = ssub.s32 %s16, 1
      %s22 = ssub.s32 %s16, 2
      %s23 = sadd.s32 %s16, 1
      %s24 = ssub.s32 %s16, %s23
      %p25 = scmp.eq.s32.totalorder %s24, 0
      %s27 = sadd.s32 %s26, 1
      %s28 = scalar_select %p25, %s26, %s27
      %p31 = pneg %p25
      %p32 = scmp.eq.s32.totalorder %s16, 7
      %p33 = por %p31, %p32
      %p34 = scmp.ne.s32.totalorder %s26, %s29
      %p35 = scmp.eq.s32.totalorder %s16, 0
      %p36 = por %p34, %p35
      %p37 = scmp.ne.s32.totalorder %s26, %s29
      %p38 = scmp.eq.s32.totalorder %s21, 7
      %p39 = por %p37, %p38
      %p40 = scmp.ne.s32.totalorder %s29, %s30
      %p41 = scmp.eq.s32.totalorder %s21, 0
      %p42 = por %p40, %p41
      %p43 = scmp.ne.s32.totalorder %s29, %s30
      %p44 = scmp.eq.s32.totalorder %s22, 7
      %p45 = por %p43, %p44
      %p47 = scmp.ne.s32.totalorder %s30, %s46
      %p48 = scmp.eq.s32.totalorder %s22, 0
      %p49 = por %p47, %p48
      %s51 = sadd.s32 %s50, 1
      %p54 = scmp.eq.s32.totalorder %s16, 7
      %p55 = scmp.ne.s32.totalorder %s50, %s52
      %p56 = scmp.eq.s32.totalorder %s16, 0
      %p57 = por %p55, %p56
      %p58 = scmp.ne.s32.totalorder %s50, %s52
      %p59 = scmp.eq.s32.totalorder %s21, 7
      %p60 = por %p58, %p59
      %p61 = scmp.ne.s32.totalorder %s52, %s53
      %p62 = scmp.eq.s32.totalorder %s21, 0
      %p63 = por %p61, %p62
      %p64 = scmp.ne.s32.totalorder %s52, %s53
      %p65 = scmp.eq.s32.totalorder %s22, 7
      %p66 = por %p64, %p65
      %p68 = scmp.ne.s32.totalorder %s53, %s67
      %p69 = scmp.eq.s32.totalorder %s22, 0
      %p70 = por %p68, %p69
      %s72 = sadd.s32 %s71, 1
      %p75 = scmp.eq.s32.totalorder %s16, 7
      %p76 = scmp.ne.s32.totalorder %s71, %s73
      %p77 = scmp.eq.s32.totalorder %s16, 0
      %p78 = por %p76, %p77
      %p79 = scmp.ne.s32.totalorder %s71, %s73
      %p80 = scmp.eq.s32.totalorder %s21, 7
      %p81 = por %p79, %p80
      %p82 = scmp.ne.s32.totalorder %s73, %s74
      %p83 = scmp.eq.s32.totalorder %s21, 0
      %p84 = por %p82, %p83
      %p85 = scmp.ne.s32.totalorder %s73, %s74
      %p86 = scmp.eq.s32.totalorder %s22, 7
      %p87 = por %p85, %p86
      %p89 = scmp.ne.s32.totalorder %s74, %s88
      %p90 = scmp.eq.s32.totalorder %s22, 0
      %p91 = por %p89, %p90
      %s93 = sadd.s32 %s92, 1
      %p96 = scmp.eq.s32.totalorder %s16, 7
      %p97 = scmp.ne.s32.totalorder %s92, %s94
      %p98 = scmp.eq.s32.totalorder %s16, 0
      %p99 = por %p97, %p98
      %p100 = scmp.ne.s32.totalorder %s92, %s94
      %p101 = scmp.eq.s32.totalorder %s21, 7
      %p102 = por %p100, %p101
      %p103 = scmp.ne.s32.totalorder %s94, %s95
      %p104 = scmp.eq.s32.totalorder %s21, 0
      %p105 = por %p103, %p104
      %p106 = scmp.ne.s32.totalorder %s94, %s95
      %p107 = scmp.eq.s32.totalorder %s22, 7
      %p108 = por %p106, %p107
      %p110 = scmp.ne.s32.totalorder %s95, %s109
      %p111 = scmp.eq.s32.totalorder %s22, 0
      %p112 = por %p110, %p111
      %s114 = sadd.s32 %s113, 1
      %p117 = scmp.eq.s32.totalorder %s16, 7
      %p118 = scmp.ne.s32.totalorder %s113, %s115
      %p119 = scmp.eq.s32.totalorder %s16, 0
      %p120 = por %p118, %p119
      %p121 = scmp.ne.s32.totalorder %s113, %s115
      %p122 = scmp.eq.s32.totalorder %s21, 7
      %p123 = por %p121, %p122
      %p124 = scmp.ne.s32.totalorder %s115, %s116
      %p125 = scmp.eq.s32.totalorder %s21, 0
      %p126 = por %p124, %p125
      %p127 = scmp.ne.s32.totalorder %s115, %s116
      %p128 = scmp.eq.s32.totalorder %s22, 7
      %p129 = por %p127, %p128
      %p131 = scmp.ne.s32.totalorder %s116, %s130
      %p132 = scmp.eq.s32.totalorder %s22, 0
      %p133 = por %p131, %p132
      %s135 = sadd.s32 %s134, 1
      %p138 = scmp.eq.s32.totalorder %s16, 7
      %p139 = scmp.ne.s32.totalorder %s134, %s136
      %p140 = scmp.eq.s32.totalorder %s16, 0
      %p141 = por %p139, %p140
      %p142 = scmp.ne.s32.totalorder %s134, %s136
      %p143 = scmp.eq.s32.totalorder %s21, 7
      %p144 = por %p142, %p143
      %p145 = scmp.ne.s32.totalorder %s136, %s137
      %p146 = scmp.eq.s32.totalorder %s21, 0
      %p147 = por %p145, %p146
      %p148 = scmp.ne.s32.totalorder %s136, %s137
      %p149 = scmp.eq.s32.totalorder %s22, 7
      %p150 = por %p148, %p149
      %p152 = scmp.ne.s32.totalorder %s137, %s151
      %p153 = scmp.eq.s32.totalorder %s22, 0
      %p154 = por %p152, %p153
      %s156 = sadd.s32 %s155, 1
      %p159 = scmp.eq.s32.totalorder %s16, 7
      %p160 = scmp.ne.s32.totalorder %s155, %s157
      %p161 = scmp.eq.s32.totalorder %s16, 0
      %p162 = por %p160, %p161
      %p163 = scmp.ne.s32.totalorder %s155, %s157
      %p164 = scmp.eq.s32.totalorder %s21, 7
      %p165 = por %p163, %p164
      %p166 = scmp.ne.s32.totalorder %s157, %s158
      %p167 = scmp.eq.s32.totalorder %s21, 0
      %p168 = por %p166, %p167
      %p169 = scmp.ne.s32.totalorder %s157, %s158
      %p170 = scmp.eq.s32.totalorder %s22, 7
      %p171 = por %p169, %p170
      %p173 = scmp.ne.s32.totalorder %s158, %s172
      %p174 = scmp.eq.s32.totalorder %s22, 0
      %p175 = por %p173, %p174
      %s176 = ssub.s32 %s16, %s23
      %p177 = scmp.eq.s32.totalorder %s176, 0
      %s179 = sadd.s32 %s178, 1
      %s180 = scalar_select %p177, %s178, %s179
      %p183 = pneg %p177
      %p184 = scmp.eq.s32.totalorder %s16, 7
      %p185 = por %p183, %p184
      %p186 = scmp.ne.s32.totalorder %s178, %s181
      %p187 = scmp.eq.s32.totalorder %s16, 0
      %p188 = por %p186, %p187
      %p189 = scmp.ne.s32.totalorder %s178, %s181
      %p190 = scmp.eq.s32.totalorder %s21, 7
      %p191 = por %p189, %p190
      %p192 = scmp.ne.s32.totalorder %s181, %s182
      %p193 = scmp.eq.s32.totalorder %s21, 0
      %p194 = por %p192, %p193
      %p195 = scmp.ne.s32.totalorder %s181, %s182
      %p196 = scmp.eq.s32.totalorder %s22, 7
      %p197 = por %p195, %p196
      %p199 = scmp.ne.s32.totalorder %s182, %s198
      %p200 = scmp.eq.s32.totalorder %s22, 0
      %p201 = por %p199, %p200
      %p202 = scmp.le.s32.totalorder 1, %s16
      %p203 = scmp.lt.s32.totalorder %s16, 9
      %p204 = pnand %p202, %p203
      %p205 = pneg %p204
      // Predicated region
      $region9: #{icm_forward.1} parent=5 // pred_check
        _
      $region10: #{icm_forward.1} parent=5 // pred_check_branch
        %207 = sbr.rel (%p204) target = $region12
      $region11: #{icm_forward.1} parent=5 // pred_region
        %s208 = ssub.s32 %s16, 1
        // Predicated region
        $region13: #{icm_forward.1} parent=11 // pred_check
          %p209 = pneg %p63
        $region14: #{icm_forward.1} parent=11 // pred_check_branch
          %211 = sbr.rel (%p209) target = $region16
        $region15: #{icm_forward.1} parent=11 // pred_region
          _
        $region16: #{icm_forward.1} parent=11 // pred_fallthru
          _
        // Predicated region
        $region17: #{icm_forward.1} parent=11 // pred_check
          %p212 = pneg %p84
        $region18: #{icm_forward.1} parent=11 // pred_check_branch
          %214 = sbr.rel (%p212) target = $region20
        $region19: #{icm_forward.1} parent=11 // pred_region
          _
        $region20: #{icm_forward.1} parent=11 // pred_fallthru
          _
        // Predicated region
        $region21: #{icm_forward.1} parent=11 // pred_check
          %p215 = pneg %p105
        $region22: #{icm_forward.1} parent=11 // pred_check_branch
          %217 = sbr.rel (%p215) target = $region24
        $region23: #{icm_forward.1} parent=11 // pred_region
          _
        $region24: #{icm_forward.1} parent=11 // pred_fallthru
          _
        // Predicated region
        $region25: #{icm_forward.1} parent=11 // pred_check
          %p218 = pneg %p126
        $region26: #{icm_forward.1} parent=11 // pred_check_branch
          %220 = sbr.rel (%p218) target = $region28
        $region27: #{icm_forward.1} parent=11 // pred_region
          _
        $region28: #{icm_forward.1} parent=11 // pred_fallthru
          _
        // Predicated region
        $region29: #{icm_forward.1} parent=11 // pred_check
          %p221 = pneg %p147
        $region30: #{icm_forward.1} parent=11 // pred_check_branch
          %223 = sbr.rel (%p221) target = $region32
        $region31: #{icm_forward.1} parent=11 // pred_region
          _
        $region32: #{icm_forward.1} parent=11 // pred_fallthru
          _
        // Predicated region
        $region33: #{icm_forward.1} parent=11 // pred_check
          %p224 = pneg %p168
        $region34: #{icm_forward.1} parent=11 // pred_check_branch
          %226 = sbr.rel (%p224) target = $region36
        $region35: #{icm_forward.1} parent=11 // pred_region
          _
        $region36: #{icm_forward.1} parent=11 // pred_fallthru
          _
      $region12: #{icm_forward.1} parent=5 // pred_fallthru
        _
      %p227 = scmp.lt.s32.totalorder %s16, 8
      // Predicated region
      $region37: #{icm_forward.1} parent=5 // pred_check
        %p228 = pneg %p227
      $region38: #{icm_forward.1} parent=5 // pred_check_branch
        %230 = sbr.rel (%p228) target = $region40
      $region39: #{icm_forward.1} parent=5 // pred_region
        // Predicated region
        $region41: #{icm_forward.1} parent=39 // pred_check
          %p231 = pneg %p36
        $region42: #{icm_forward.1} parent=39 // pred_check_branch
          %233 = sbr.rel (%p231) target = $region44
        $region43: #{icm_forward.1} parent=39 // pred_region
          %s234 = smul.u32 16, %s16
          %p235 = scmp.lt.s32.totalorder %s234, 127
          %s236 = scalar_select %p235, %s234, 127
          %s237 = smul.addr %s236, 4
          %s238 = scalar_lea.vmem %s0, %s237
          %s239 = smul.u32 16, %s16
        $region44: #{icm_forward.1} parent=39 // pred_fallthru
          _
      $region40: #{icm_forward.1} parent=5 // pred_fallthru
        _
      %p240 = scmp.le.s32.totalorder 1, %s16
      %p241 = scmp.lt.s32.totalorder %s16, 9
      %p242 = pnand %p240, %p241
      %p243 = pneg %p242
      // Predicated region
      $region45: #{icm_forward.1} parent=5 // pred_check
        _
      $region46: #{icm_forward.1} parent=5 // pred_check_branch
        %245 = sbr.rel (%p242) target = $region48
      $region47: #{icm_forward.1} parent=5 // pred_region
        %s246 = ssub.s32 %s16, 1
        %s247 = smul.u32 16, %s21
        %p248 = scmp.lt.s32.totalorder %s247, 127
        %s249 = scalar_select %p248, %s247, 127
        %s250 = smul.addr %s249, 4
        %s251 = scalar_lea.vmem %s0, %s250
        %p252 = pneg %p42
        %p253 = pneg %p39
        %p254 = pneg %p63
        %p255 = pneg %p60
        %p256 = pneg %p84
        %p257 = pneg %p81
        %p258 = pneg %p105
        %p259 = pneg %p102
        %p260 = pneg %p126
        %p261 = pneg %p123
        %p262 = pneg %p147
        %p263 = pneg %p144
        %p264 = pneg %p168
        %p265 = pneg %p165
        %p266 = pneg %p194
        %p267 = pneg %p191
        %s268 = sand.u32 %s181, 1
        %s269 = scalar_lea.sflag [#allocation3], %s268
        %s270 = sand.u32 %s181, 1
        %s271 = scalar_lea.vmem [#allocation2], %s270
        %s272 = smul.u32 16, %s21
        %p273 = scmp.lt.s32.totalorder %s272, 127
        %s274 = scalar_select %p273, %s272, 127
        %s275 = smul.addr %s274, 4
        %s276 = scalar_lea.vmem %s0, %s275
        %s277 = smul.u32 16, %s21
        %v279 = vld [vmem:[%s276] sm:$0xf]
        %v280 = vld [vmem:[%s276 + $0x4] sm:$0xf]
        %v281 = vld [vmem:[%s276 + $0x8] sm:$0xf]
        %v282 = vld [vmem:[%s276 + $0xc] sm:$0xf]
        %v283 = vld [vmem:[%s276 + $0x10] sm:$0xf]
        %v284 = vld [vmem:[%s276 + $0x14] sm:$0xf]
        %v285 = vld [vmem:[%s276 + $0x18] sm:$0xf]
        %v286 = vld [vmem:[%s276 + $0x1c] sm:$0xf]
        %v287 = vld [vmem:[%s276 + $0x20] sm:$0xf]
        %v288 = vld [vmem:[%s276 + $0x24] sm:$0xf]
        %v289 = vld [vmem:[%s276 + $0x28] sm:$0xf]
        %v290 = vld [vmem:[%s276 + $0x2c] sm:$0xf]
        %v291 = vld [vmem:[%s276 + $0x30] sm:$0xf]
        %v292 = vld [vmem:[%s276 + $0x34] sm:$0xf]
        %v293 = vld [vmem:[%s276 + $0x38] sm:$0xf]
        %v294 = vld [vmem:[%s276 + $0x3c] sm:$0xf]
        %v295 = vld [vmem:[%s1] sm:$0xff]
        %v296 = vld [vmem:[%s1 + $0x8] sm:$0xff]
        %v297 = vld [vmem:[%s1 + $0x10] sm:$0xff]
        %v298 = vld [vmem:[%s1 + $0x18] sm:$0xff]
        %v299 = vld [vmem:[%s1 + $0x20] sm:$0xff]
        %v300 = vld [vmem:[%s1 + $0x28] sm:$0xff]
        %v301 = vld [vmem:[%s1 + $0x30] sm:$0xff]
        %v302 = vld [vmem:[%s1 + $0x38] sm:$0xff]
        %v303 = vld [vmem:[%s1 + $0x40] sm:$0xff]
        %v304 = vld [vmem:[%s2] sm:$0x3]
        %v306 = vlaneseq
        %v307 = vshrl.u32 %v306, 7
        %v308 = vsub.s32 0, %v307
        %v309 = vrot.slane %v304, %v308
        %v310 = vlaneseq
        %v311 = vshrl.u32 %v310, 7
        %v312 = vsub.s32 1, %v311
        %v313 = vrot.slane %v304, %v312
        %v332 = vunpack.c.l.b16 %v279
        %v333 = vunpack.c.l.b16 %v280
        %v334 = vunpack.c.l.b16 %v281
        %v335 = vunpack.c.l.b16 %v282
        %v336 = vunpack.c.l.b16 %v283
        %v337 = vunpack.c.l.b16 %v284
        %v338 = vunpack.c.l.b16 %v285
        %v339 = vunpack.c.l.b16 %v286
        %v340 = vunpack.c.l.b16 %v287
        %v341 = vunpack.c.l.b16 %v288
        %v342 = vunpack.c.l.b16 %v289
        %v343 = vunpack.c.l.b16 %v290
        %v344 = vunpack.c.l.b16 %v291
        %v345 = vunpack.c.l.b16 %v292
        %v346 = vunpack.c.l.b16 %v293
        %v347 = vunpack.c.l.b16 %v294
        %v348 = vpack.c.b16 %v333, %v332
        %v349 = vpack.c.b16 %v335, %v334
        %v350 = vpack.c.b16 %v337, %v336
        %v351 = vpack.c.b16 %v339, %v338
        %v352 = vpack.c.b16 %v341, %v340
        %v353 = vpack.c.b16 %v343, %v342
        %v354 = vpack.c.b16 %v345, %v344
        %v355 = vpack.c.b16 %v347, %v346
        %v365 = vunpack.c.l.b16 %v295
        %v366 = vunpack.c.h.b16 %v295
        %v367 = vunpack.c.l.b16 %v296
        %v368 = vunpack.c.h.b16 %v296
        %v369 = vunpack.c.l.b16 %v297
        %v370 = vunpack.c.h.b16 %v297
        %v371 = vunpack.c.l.b16 %v298
        %v372 = vunpack.c.h.b16 %v298
        %v373 = vunpack.c.l.b16 %v299
        %v374 = vunpack.c.h.b16 %v299
        %v375 = vunpack.c.l.b16 %v300
        %v376 = vunpack.c.h.b16 %v300
        %v377 = vunpack.c.l.b16 %v301
        %v378 = vunpack.c.h.b16 %v301
        %v379 = vunpack.c.l.b16 %v302
        %v380 = vunpack.c.h.b16 %v302
        %v381 = vunpack.c.l.b16 %v303
        %v382 = vunpack.c.h.b16 %v303
        %v383 = vpack.c.b16 %v367, %v365
        %v384 = vpack.c.b16 %v368, %v366
        %v385 = vpack.c.b16 %v371, %v369
        %v386 = vpack.c.b16 %v372, %v370
        %v387 = vpack.c.b16 %v375, %v373
        %v388 = vpack.c.b16 %v376, %v374
        %v389 = vpack.c.b16 %v379, %v377
        %v390 = vpack.c.b16 %v380, %v378
        %v391 = vpack.c.b16 %v381, %v381
        %v392 = vpack.c.b16 %v382, %v382
        %vm401 = vcmask 588800
        %v403 = vsel %vm401, %v348, 0
        %v406 = vsel %vm401, %v349, 0
        %v409 = vsel %vm401, %v350, 0
        %v412 = vsel %vm401, %v351, 0
        %v415 = vsel %vm401, %v352, 0
        %v418 = vsel %vm401, %v353, 0
        %v421 = vsel %vm401, %v354, 0
        %v424 = vsel %vm401, %v355, 0
        %vm426 = vcmask 1043456
        %v428 = vsel %vm426, %v391, 0
        %v431 = vsel %vm426, %v392, 0
        %433 = vmatprep.subr.bf16.mxu0 %v384
        %434 = vmatpush1.bf16.msra.mxu0 %v383
        %435 = vmatprep.subr.bf16.mxu0 %v386
        %436 = vmatpush1.bf16.msra.mxu0 %v385
        %437 = vmatprep.subr.bf16.mxu0 %v388
        %438 = vmatpush1.bf16.msra.mxu0 %v387
        %439 = vmatprep.subr.bf16.mxu0 %v390
        %440 = vmatpush1.bf16.msra.mxu0 %v389
        %441 = vmatprep.subr.bf16.mxu0 %v431
        %442 = vmatpush1.bf16.msra.mxu0 %v428
        %443 = vmatprep.subr.bf16.mxu0 0
        %444 = vmatpush1.bf16.msra.mxu0 0
        %445 = vmatprep.subr.bf16.mxu0 0
        %446 = vmatpush1.bf16.msra.mxu0 0
        %447 = vmatprep.subr.bf16.mxu0 0
        %448 = vmatpush1.bf16.msra.mxu0 0
        %449 = vmatprep.subr.bf16.mxu0 0
        %450 = vmatpush1.bf16.msra.mxu0 0
        %451 = vmatprep.subr.bf16.mxu0 0
        %452 = vmatpush1.bf16.msra.mxu0 0
        %453 = vmatprep.subr.bf16.mxu0 0
        %454 = vmatpush1.bf16.msra.mxu0 0
        %455 = vmatprep.subr.bf16.mxu0 0
        %456 = vmatpush1.bf16.msra.mxu0 0
        %457 = vmatprep.subr.bf16.mxu0 0
        %458 = vmatpush1.bf16.msra.mxu0 0
        %459 = vmatprep.subr.bf16.mxu0 0
        %460 = vmatpush1.bf16.msra.mxu0 0
        %461 = vmatprep.subr.bf16.mxu0 0
        %462 = vmatpush1.bf16.msra.mxu0 0
        %463 = vmatprep.subr.bf16.mxu0 0
        %464 = vmatpush1.bf16.msra.mxu0 0
        %465 = vmatprep.mubr.bf16.mxu0 0
        %466 = vmatmul.mubr.bf16.gmra.mrb[0].mxu0 %v403
        %v467 = vpop.f32.mrb[0].mxu0
        %v468 = vadd.f32 %v309, %v467
        %v469 = vpop.f32.mrb[0].mxu0
        %v470 = vadd.f32 %v313, %v469
        %v471 = vpop.f32.mrb[0].mxu0
        %v472 = vadd.f32 %v309, %v471
        %v473 = vpop.f32.mrb[0].mxu0
        %v474 = vadd.f32 %v313, %v473
        %475 = vmatprep.mubr.bf16.mxu0 0
        %476 = vmatmul.mubr.bf16.gmra.mrb[0].mxu0 %v406
        %v477 = vpop.f32.mrb[0].mxu0
        %v478 = vadd.f32 %v309, %v477
        %v479 = vpop.f32.mrb[0].mxu0
        %v480 = vadd.f32 %v313, %v479
        %v481 = vpop.f32.mrb[0].mxu0
        %v482 = vadd.f32 %v309, %v481
        %v483 = vpop.f32.mrb[0].mxu0
        %v484 = vadd.f32 %v313, %v483
        %485 = vmatprep.mubr.bf16.mxu0 0
        %486 = vmatmul.mubr.bf16.gmra.mrb[0].mxu0 %v409
        %v487 = vpop.f32.mrb[0].mxu0
        %v488 = vadd.f32 %v309, %v487
        %v489 = vpop.f32.mrb[0].mxu0
        %v490 = vadd.f32 %v313, %v489
        %v491 = vpop.f32.mrb[0].mxu0
        %v492 = vadd.f32 %v309, %v491
        %v493 = vpop.f32.mrb[0].mxu0
        %v494 = vadd.f32 %v313, %v493
        %495 = vmatprep.mubr.bf16.mxu0 0
        %496 = vmatmul.mubr.bf16.gmra.mrb[0].mxu0 %v412
        %v497 = vpop.f32.mrb[0].mxu0
        %v498 = vadd.f32 %v309, %v497
        %v499 = vpop.f32.mrb[0].mxu0
        %v500 = vadd.f32 %v313, %v499
        %v501 = vpop.f32.mrb[0].mxu0
        %v502 = vadd.f32 %v309, %v501
        %v503 = vpop.f32.mrb[0].mxu0
        %v504 = vadd.f32 %v313, %v503
        %505 = vmatprep.mubr.bf16.mxu0 0
        %506 = vmatmul.mubr.bf16.gmra.mrb[0].mxu0 %v415
        %v507 = vpop.f32.mrb[0].mxu0
        %v508 = vadd.f32 %v309, %v507
        %v509 = vpop.f32.mrb[0].mxu0
        %v510 = vadd.f32 %v313, %v509
        %v511 = vpop.f32.mrb[0].mxu0
        %v512 = vadd.f32 %v309, %v511
        %v513 = vpop.f32.mrb[0].mxu0
        %v514 = vadd.f32 %v313, %v513
        %515 = vmatprep.mubr.bf16.mxu0 0
        %516 = vmatmul.mubr.bf16.gmra.mrb[0].mxu0 %v418
        %v517 = vpop.f32.mrb[0].mxu0
        %v518 = vadd.f32 %v309, %v517
        %v519 = vpop.f32.mrb[0].mxu0
        %v520 = vadd.f32 %v313, %v519
        %v521 = vpop.f32.mrb[0].mxu0
        %v522 = vadd.f32 %v309, %v521
        %v523 = vpop.f32.mrb[0].mxu0
        %v524 = vadd.f32 %v313, %v523
        %525 = vmatprep.mubr.bf16.mxu0 0
        %526 = vmatmul.mubr.bf16.gmra.mrb[0].mxu0 %v421
        %v527 = vpop.f32.mrb[0].mxu0
        %v528 = vadd.f32 %v309, %v527
        %v529 = vpop.f32.mrb[0].mxu0
        %v530 = vadd.f32 %v313, %v529
        %v531 = vpop.f32.mrb[0].mxu0
        %v532 = vadd.f32 %v309, %v531
        %v533 = vpop.f32.mrb[0].mxu0
        %v534 = vadd.f32 %v313, %v533
        %535 = vmatprep.mubr.bf16.mxu0 0
        %536 = vmatmul.mubr.bf16.gmra.mrb[0].mxu0 %v424
        %v537 = vpop.f32.mrb[0].mxu0
        %v538 = vadd.f32 %v309, %v537
        %v539 = vpop.f32.mrb[0].mxu0
        %v540 = vadd.f32 %v313, %v539
        %v541 = vpop.f32.mrb[0].mxu0
        %v542 = vadd.f32 %v309, %v541
        %v543 = vpop.f32.mrb[0].mxu0
        %v544 = vadd.f32 %v313, %v543
        %545 = vdwg.mxu0
        %v546 = vpack.c.bf16 %v472, %v468
        %v547 = vpack.c.bf16 %v482, %v478
        %v548 = vpack.c.bf16 %v492, %v488
        %v549 = vpack.c.bf16 %v502, %v498
        %v550 = vpack.c.bf16 %v512, %v508
        %v551 = vpack.c.bf16 %v522, %v518
        %v552 = vpack.c.bf16 %v532, %v528
        %v553 = vpack.c.bf16 %v542, %v538
        %v554 = vld [vmem:[%s3] sm:$0xf]
        %v555 = vld [vmem:[%s3 + $0x4] sm:$0xf]
        %v556 = vld [vmem:[%s3 + $0x8] sm:$0xf]
        %v557 = vld [vmem:[%s3 + $0xc] sm:$0xf]
        %v558 = vld [vmem:[%s3 + $0x10] sm:$0xf]
        %v559 = vld [vmem:[%s3 + $0x14] sm:$0xf]
        %v560 = vld [vmem:[%s3 + $0x18] sm:$0xf]
        %v561 = vld [vmem:[%s3 + $0x1c] sm:$0xf]
        %v562 = vld [vmem:[%s3 + $0x20] sm:$0xf]
        %v563 = vld [vmem:[%s3 + $0x24] sm:$0xf]
        %v564 = vld [vmem:[%s3 + $0x28] sm:$0xf]
        %v565 = vld [vmem:[%s3 + $0x2c] sm:$0xf]
        %v566 = vld [vmem:[%s3 + $0x30] sm:$0xf]
        %v567 = vld [vmem:[%s3 + $0x34] sm:$0xf]
        %v568 = vld [vmem:[%s3 + $0x38] sm:$0xf]
        %v569 = vld [vmem:[%s3 + $0x3c] sm:$0xf]
        %v570 = vld [vmem:[%s4] sm:$0x1]
        %v572 = vlaneseq
        %v573 = vshrl.u32 %v572, 7
        %v574 = vsub.s32 0, %v573
        %v575 = vrot.slane %v570, %v574
        %v593 = vunpack.c.l.b16 %v554
        %v594 = vunpack.c.l.b16 %v555
        %v595 = vunpack.c.l.b16 %v556
        %v596 = vunpack.c.l.b16 %v557
        %v597 = vunpack.c.l.b16 %v558
        %v598 = vunpack.c.l.b16 %v559
        %v599 = vunpack.c.l.b16 %v560
        %v600 = vunpack.c.l.b16 %v561
        %v601 = vunpack.c.l.b16 %v562
        %v602 = vunpack.c.l.b16 %v563
        %v603 = vunpack.c.l.b16 %v564
        %v604 = vunpack.c.l.b16 %v565
        %v605 = vunpack.c.l.b16 %v566
        %v606 = vunpack.c.l.b16 %v567
        %v607 = vunpack.c.l.b16 %v568
        %v608 = vunpack.c.l.b16 %v569
        %v609 = vpack.c.b16 %v594, %v593
        %v610 = vpack.c.b16 %v596, %v595
        %v611 = vpack.c.b16 %v598, %v597
        %v612 = vpack.c.b16 %v600, %v599
        %v613 = vpack.c.b16 %v602, %v601
        %v614 = vpack.c.b16 %v604, %v603
        %v615 = vpack.c.b16 %v606, %v605
        %v616 = vpack.c.b16 %v608, %v607
        %625 = vmatprep.subr.bf16.mxu0 0
        %626 = vmatpush1.bf16.msra.mxu0 %v609
        %627 = vmatprep.subr.bf16.mxu0 0
        %628 = vmatpush1.bf16.msra.mxu0 %v610
        %629 = vmatprep.subr.bf16.mxu0 0
        %630 = vmatpush1.bf16.msra.mxu0 %v611
        %631 = vmatprep.subr.bf16.mxu0 0
        %632 = vmatpush1.bf16.msra.mxu0 %v612
        %633 = vmatprep.subr.bf16.mxu0 0
        %634 = vmatpush1.bf16.msra.mxu0 %v613
        %635 = vmatprep.subr.bf16.mxu0 0
        %636 = vmatpush1.bf16.msra.mxu0 %v614
        %637 = vmatprep.subr.bf16.mxu0 0
        %638 = vmatpush1.bf16.msra.mxu0 %v615
        %639 = vmatprep.subr.bf16.mxu0 0
        %640 = vmatpush1.bf16.msra.mxu0 %v616
        %641 = vmatprep.subr.bf16.mxu0 0
        %642 = vmatpush1.bf16.msra.mxu0 0
        %643 = vmatprep.subr.bf16.mxu0 0
        %644 = vmatpush1.bf16.msra.mxu0 0
        %645 = vmatprep.subr.bf16.mxu0 0
        %646 = vmatpush1.bf16.msra.mxu0 0
        %647 = vmatprep.subr.bf16.mxu0 0
        %648 = vmatpush1.bf16.msra.mxu0 0
        %649 = vmatprep.subr.bf16.mxu0 0
        %650 = vmatpush1.bf16.msra.mxu0 0
        %651 = vmatprep.subr.bf16.mxu0 0
        %652 = vmatpush1.bf16.msra.mxu0 0
        %653 = vmatprep.subr.bf16.mxu0 0
        %654 = vmatpush1.bf16.msra.mxu0 0
        %655 = vmatprep.subr.bf16.mxu0 0
        %656 = vmatpush1.bf16.msra.mxu0 0
        %657 = vmatprep.mubr.bf16.mxu0 0
        %658 = vmatmul.mubr.bf16.gmra.mrb[0].mxu0 %v546
        %v659 = vpop.f32.mrb[0].mxu0
        %v660 = vadd.f32 %v575, %v659
        %v661 = vpop.f32.mrb[0].mxu0
        %v662 = vpop.f32.mrb[0].mxu0
        %v663 = vadd.f32 %v575, %v662
        %v664 = vpop.f32.mrb[0].mxu0
        %665 = vmatprep.mubr.bf16.mxu0 0
        %666 = vmatmul.mubr.bf16.gmra.mrb[0].mxu0 %v547
        %v667 = vpop.f32.mrb[0].mxu0
        %v668 = vadd.f32 %v575, %v667
        %v669 = vpop.f32.mrb[0].mxu0
        %v670 = vpop.f32.mrb[0].mxu0
        %v671 = vadd.f32 %v575, %v670
        %v672 = vpop.f32.mrb[0].mxu0
        %673 = vmatprep.mubr.bf16.mxu0 0
        %674 = vmatmul.mubr.bf16.gmra.mrb[0].mxu0 %v548
        %v675 = vpop.f32.mrb[0].mxu0
        %v676 = vadd.f32 %v575, %v675
        %v677 = vpop.f32.mrb[0].mxu0
        %v678 = vpop.f32.mrb[0].mxu0
        %v679 = vadd.f32 %v575, %v678
        %v680 = vpop.f32.mrb[0].mxu0
        %681 = vmatprep.mubr.bf16.mxu0 0
        %682 = vmatmul.mubr.bf16.gmra.mrb[0].mxu0 %v549
        %v683 = vpop.f32.mrb[0].mxu0
        %v684 = vadd.f32 %v575, %v683
        %v685 = vpop.f32.mrb[0].mxu0
        %v686 = vpop.f32.mrb[0].mxu0
        %v687 = vadd.f32 %v575, %v686
        %v688 = vpop.f32.mrb[0].mxu0
        %689 = vmatprep.mubr.bf16.mxu0 0
        %690 = vmatmul.mubr.bf16.gmra.mrb[0].mxu0 %v550
        %v691 = vpop.f32.mrb[0].mxu0
        %v692 = vadd.f32 %v575, %v691
        %v693 = vpop.f32.mrb[0].mxu0
        %v694 = vpop.f32.mrb[0].mxu0
        %v695 = vadd.f32 %v575, %v694
        %v696 = vpop.f32.mrb[0].mxu0
        %697 = vmatprep.mubr.bf16.mxu0 0
        %698 = vmatmul.mubr.bf16.gmra.mrb[0].mxu0 %v551
        %v699 = vpop.f32.mrb[0].mxu0
        %v700 = vadd.f32 %v575, %v699
        %v701 = vpop.f32.mrb[0].mxu0
        %v702 = vpop.f32.mrb[0].mxu0
        %v703 = vadd.f32 %v575, %v702
        %v704 = vpop.f32.mrb[0].mxu0
        %705 = vmatprep.mubr.bf16.mxu0 0
        %706 = vmatmul.mubr.bf16.gmra.mrb[0].mxu0 %v552
        %v707 = vpop.f32.mrb[0].mxu0
        %v708 = vadd.f32 %v575, %v707
        %v709 = vpop.f32.mrb[0].mxu0
        %v710 = vpop.f32.mrb[0].mxu0
        %v711 = vadd.f32 %v575, %v710
        %v712 = vpop.f32.mrb[0].mxu0
        %713 = vmatprep.mubr.bf16.mxu0 0
        %714 = vmatmul.mubr.bf16.gmra.mrb[0].mxu0 %v553
        %v715 = vpop.f32.mrb[0].mxu0
        %v716 = vadd.f32 %v575, %v715
        %v717 = vpop.f32.mrb[0].mxu0
        %v718 = vpop.f32.mrb[0].mxu0
        %v719 = vadd.f32 %v575, %v718
        %v720 = vpop.f32.mrb[0].mxu0
        %721 = vdwg.mxu0
        %v722 = vmax.f32 %v660, 0.0
        %v723 = vmax.f32 %v663, 0.0
        %v724 = vmax.f32 %v668, 0.0
        %v725 = vmax.f32 %v671, 0.0
        %v726 = vmax.f32 %v676, 0.0
        %v727 = vmax.f32 %v679, 0.0
        %v728 = vmax.f32 %v684, 0.0
        %v729 = vmax.f32 %v687, 0.0
        %v730 = vmax.f32 %v692, 0.0
        %v731 = vmax.f32 %v695, 0.0
        %v732 = vmax.f32 %v700, 0.0
        %v733 = vmax.f32 %v703, 0.0
        %v734 = vmax.f32 %v708, 0.0
        %v735 = vmax.f32 %v711, 0.0
        %v736 = vmax.f32 %v716, 0.0
        %v737 = vmax.f32 %v719, 0.0
        %v738 = vpack.c.bf16 %v723, %v722
        %v739 = vpack.c.bf16 %v725, %v724
        %v740 = vpack.c.bf16 %v727, %v726
        %v741 = vpack.c.bf16 %v729, %v728
        %v742 = vpack.c.bf16 %v731, %v730
        %v743 = vpack.c.bf16 %v733, %v732
        %v744 = vpack.c.bf16 %v735, %v734
        %v745 = vpack.c.bf16 %v737, %v736
        %v746 = vld [vmem:[%s5] sm:$0xf]
        %v747 = vld [vmem:[%s5 + $0x4] sm:$0xf]
        %v748 = vld [vmem:[%s5 + $0x8] sm:$0xf]
        %v749 = vld [vmem:[%s5 + $0xc] sm:$0xf]
        %v750 = vld [vmem:[%s6] sm:$0x1]
        %v752 = vlaneseq
        %v753 = vshrl.u32 %v752, 7
        %v754 = vsub.s32 0, %v753
        %v755 = vrot.slane %v750, %v754
        %v761 = vunpack.c.l.b16 %v746
        %v762 = vunpack.c.l.b16 %v747
        %v763 = vunpack.c.l.b16 %v748
        %v764 = vunpack.c.l.b16 %v749
        %v765 = vpack.c.b16 %v762, %v761
        %v766 = vpack.c.b16 %v764, %v763
        %vm769 = vcmask 261120
        %v771 = vsel %vm769, %v738, 0
        %v774 = vsel %vm769, %v739, 0
        %v777 = vsel %vm769, %v740, 0
        %v780 = vsel %vm769, %v741, 0
        %v783 = vsel %vm769, %v742, 0
        %v786 = vsel %vm769, %v743, 0
        %v789 = vsel %vm769, %v744, 0
        %v792 = vsel %vm769, %v745, 0
        %794 = vmatprep.subr.bf16.mxu0 0
        %795 = vmatpush1.bf16.msra.mxu0 %v765
        %796 = vmatprep.subr.bf16.mxu0 0
        %797 = vmatpush1.bf16.msra.mxu0 %v766
        %798 = vmatprep.subr.bf16.mxu0 0
        %799 = vmatpush1.bf16.msra.mxu0 0
        %800 = vmatprep.subr.bf16.mxu0 0
        %801 = vmatpush1.bf16.msra.mxu0 0
        %802 = vmatprep.subr.bf16.mxu0 0
        %803 = vmatpush1.bf16.msra.mxu0 0
        %804 = vmatprep.subr.bf16.mxu0 0
        %805 = vmatpush1.bf16.msra.mxu0 0
        %806 = vmatprep.subr.bf16.mxu0 0
        %807 = vmatpush1.bf16.msra.mxu0 0
        %808 = vmatprep.subr.bf16.mxu0 0
        %809 = vmatpush1.bf16.msra.mxu0 0
        %810 = vmatprep.subr.bf16.mxu0 0
        %811 = vmatpush1.bf16.msra.mxu0 0
        %812 = vmatprep.subr.bf16.mxu0 0
        %813 = vmatpush1.bf16.msra.mxu0 0
        %814 = vmatprep.subr.bf16.mxu0 0
        %815 = vmatpush1.bf16.msra.mxu0 0
        %816 = vmatprep.subr.bf16.mxu0 0
        %817 = vmatpush1.bf16.msra.mxu0 0
        %818 = vmatprep.subr.bf16.mxu0 0
        %819 = vmatpush1.bf16.msra.mxu0 0
        %820 = vmatprep.subr.bf16.mxu0 0
        %821 = vmatpush1.bf16.msra.mxu0 0
        %822 = vmatprep.subr.bf16.mxu0 0
        %823 = vmatpush1.bf16.msra.mxu0 0
        %824 = vmatprep.subr.bf16.mxu0 0
        %825 = vmatpush1.bf16.msra.mxu0 0
        %826 = vmatprep.mubr.bf16.mxu0 0
        %827 = vmatmul.mubr.bf16.gmra.mrb[0].mxu0 %v771
        %v828 = vpop.f32.mrb[0].mxu0
        %v829 = vadd.f32 %v755, %v828
        %v830 = vpop.f32.mrb[0].mxu0
        %v831 = vpop.f32.mrb[0].mxu0
        %v832 = vadd.f32 %v755, %v831
        %v833 = vpop.f32.mrb[0].mxu0
        %834 = vmatprep.mubr.bf16.mxu0 0
        %835 = vmatmul.mubr.bf16.gmra.mrb[0].mxu0 %v774
        %v836 = vpop.f32.mrb[0].mxu0
        %v837 = vadd.f32 %v755, %v836
        %v838 = vpop.f32.mrb[0].mxu0
        %v839 = vpop.f32.mrb[0].mxu0
        %v840 = vadd.f32 %v755, %v839
        %v841 = vpop.f32.mrb[0].mxu0
        %842 = vmatprep.mubr.bf16.mxu0 0
        %843 = vmatmul.mubr.bf16.gmra.mrb[0].mxu0 %v777
        %v844 = vpop.f32.mrb[0].mxu0
        %v845 = vadd.f32 %v755, %v844
        %v846 = vpop.f32.mrb[0].mxu0
        %v847 = vpop.f32.mrb[0].mxu0
        %v848 = vadd.f32 %v755, %v847
        %v849 = vpop.f32.mrb[0].mxu0
        %850 = vmatprep.mubr.bf16.mxu0 0
        %851 = vmatmul.mubr.bf16.gmra.mrb[0].mxu0 %v780
        %v852 = vpop.f32.mrb[0].mxu0
        %v853 = vadd.f32 %v755, %v852
        %v854 = vpop.f32.mrb[0].mxu0
        %v855 = vpop.f32.mrb[0].mxu0
        %v856 = vadd.f32 %v755, %v855
        %v857 = vpop.f32.mrb[0].mxu0
        %858 = vmatprep.mubr.bf16.mxu0 0
        %859 = vmatmul.mubr.bf16.gmra.mrb[0].mxu0 %v783
        %v860 = vpop.f32.mrb[0].mxu0
        %v861 = vadd.f32 %v755, %v860
        %v862 = vpop.f32.mrb[0].mxu0
        %v863 = vpop.f32.mrb[0].mxu0
        %v864 = vadd.f32 %v755, %v863
        %v865 = vpop.f32.mrb[0].mxu0
        %866 = vmatprep.mubr.bf16.mxu0 0
        %867 = vmatmul.mubr.bf16.gmra.mrb[0].mxu0 %v786
        %v868 = vpop.f32.mrb[0].mxu0
        %v869 = vadd.f32 %v755, %v868
        %v870 = vpop.f32.mrb[0].mxu0
        %v871 = vpop.f32.mrb[0].mxu0
        %v872 = vadd.f32 %v755, %v871
        %v873 = vpop.f32.mrb[0].mxu0
        %874 = vmatprep.mubr.bf16.mxu0 0
        %875 = vmatmul.mubr.bf16.gmra.mrb[0].mxu0 %v789
        %v876 = vpop.f32.mrb[0].mxu0
        %v877 = vadd.f32 %v755, %v876
        %v878 = vpop.f32.mrb[0].mxu0
        %v879 = vpop.f32.mrb[0].mxu0
        %v880 = vadd.f32 %v755, %v879
        %v881 = vpop.f32.mrb[0].mxu0
        %882 = vmatprep.mubr.bf16.mxu0 0
        %883 = vmatmul.mubr.bf16.gmra.mrb[0].mxu0 %v792
        %v884 = vpop.f32.mrb[0].mxu0
        %v885 = vadd.f32 %v755, %v884
        %v886 = vpop.f32.mrb[0].mxu0
        %v887 = vpop.f32.mrb[0].mxu0
        %v888 = vadd.f32 %v755, %v887
        %v889 = vpop.f32.mrb[0].mxu0
        %890 = vdwg.mxu0
        %v891 = vsub.f32 %v829, %v470
        %v892 = vsub.f32 %v832, %v474
        %v893 = vsub.f32 %v837, %v480
        %v894 = vsub.f32 %v840, %v484
        %v895 = vsub.f32 %v845, %v490
        %v896 = vsub.f32 %v848, %v494
        %v897 = vsub.f32 %v853, %v500
        %v898 = vsub.f32 %v856, %v504
        %v899 = vsub.f32 %v861, %v510
        %v900 = vsub.f32 %v864, %v514
        %v901 = vsub.f32 %v869, %v520
        %v902 = vsub.f32 %v872, %v524
        %v903 = vsub.f32 %v877, %v530
        %v904 = vsub.f32 %v880, %v534
        %v905 = vsub.f32 %v885, %v540
        %v906 = vsub.f32 %v888, %v544
        %v907 = vmul.f32 %v891, %v891
        %v908 = vmul.f32 %v892, %v892
        %v909 = vmul.f32 %v893, %v893
        %v910 = vmul.f32 %v894, %v894
        %v911 = vmul.f32 %v895, %v895
        %v912 = vmul.f32 %v896, %v896
        %v913 = vmul.f32 %v897, %v897
        %v914 = vmul.f32 %v898, %v898
        %v915 = vmul.f32 %v899, %v899
        %v916 = vmul.f32 %v900, %v900
        %v917 = vmul.f32 %v901, %v901
        %v918 = vmul.f32 %v902, %v902
        %v919 = vmul.f32 %v903, %v903
        %v920 = vmul.f32 %v904, %v904
        %v921 = vmul.f32 %v905, %v905
        %v922 = vmul.f32 %v906, %v906
        %vm923 = vcmask 523264
        %v925 = vsel %vm923, %v907, 0
        %v928 = vsel %vm923, %v908, 0
        %v931 = vsel %vm923, %v909, 0
        %v934 = vsel %vm923, %v910, 0
        %v937 = vsel %vm923, %v911, 0
        %v940 = vsel %vm923, %v912, 0
        %v943 = vsel %vm923, %v913, 0
        %v946 = vsel %vm923, %v914, 0
        %v949 = vsel %vm923, %v915, 0
        %v952 = vsel %vm923, %v916, 0
        %v955 = vsel %vm923, %v917, 0
        %v958 = vsel %vm923, %v918, 0
        %v961 = vsel %vm923, %v919, 0
        %v964 = vsel %vm923, %v920, 0
        %v967 = vsel %vm923, %v921, 0
        %v970 = vsel %vm923, %v922, 0
        %972 = vmatprep.subr.mxu0 0.0
        %973 = vmatpush1.msra.mxu0 0.015625
        %974 = vmatprep.subr.mxu0 0.0
        %975 = vmatpush1.msra.mxu0 0.015625
        %976 = vmatprep.subr.mxu0 0.0
        %977 = vmatpush1.msra.mxu0 0.015625
        %978 = vmatprep.subr.mxu0 0.0
        %979 = vmatpush1.msra.mxu0 0.015625
        %980 = vmatprep.subr.mxu0 0.0
        %981 = vmatpush1.msra.mxu0 0.015625
        %982 = vmatprep.subr.mxu0 0.0
        %983 = vmatpush1.msra.mxu0 0.015625
        %984 = vmatprep.subr.mxu0 0.0
        %985 = vmatpush1.msra.mxu0 0.015625
        %986 = vmatprep.subr.mxu0 0.0
        %987 = vmatpush1.msra.mxu0 0.015625
        %988 = vmatprep.subr.mxu0 0.0
        %989 = vmatpush1.msra.mxu0 0.0
        %990 = vmatprep.subr.mxu0 0.0
        %991 = vmatpush1.msra.mxu0 0.0
        %992 = vmatprep.subr.mxu0 0.0
        %993 = vmatpush1.msra.mxu0 0.0
        %994 = vmatprep.subr.mxu0 0.0
        %995 = vmatpush1.msra.mxu0 0.0
        %996 = vmatprep.subr.mxu0 0.0
        %997 = vmatpush1.msra.mxu0 0.0
        %998 = vmatprep.subr.mxu0 0.0
        %999 = vmatpush1.msra.mxu0 0.0
        %1000 = vmatprep.subr.mxu0 0.0
        %1001 = vmatpush1.msra.mxu0 0.0
        %1002 = vmatprep.subr.mxu0 0.0
        %1003 = vmatpush1.msra.mxu0 0.0
        %1004 = vmatprep.subr.mxu0 0.0
        %1005 = vmatpush1.msra.mxu0 0.0
        %1006 = vmatprep.subr.mxu0 0.0
        %1007 = vmatpush1.msra.mxu0 0.0
        %1008 = vmatprep.subr.mxu0 0.0
        %1009 = vmatpush1.msra.mxu0 0.0
        %1010 = vmatprep.subr.mxu0 0.0
        %1011 = vmatpush1.msra.mxu0 0.0
        %1012 = vmatprep.subr.mxu0 0.0
        %1013 = vmatpush1.msra.mxu0 0.0
        %1014 = vmatprep.subr.mxu0 0.0
        %1015 = vmatpush1.msra.mxu0 0.0
        %1016 = vmatprep.subr.mxu0 0.0
        %1017 = vmatpush1.msra.mxu0 0.0
        %1018 = vmatprep.subr.mxu0 0.0
        %1019 = vmatpush1.msra.mxu0 0.0
        %1020 = vmatprep.subr.mxu0 0.0
        %1021 = vmatpush1.msra.mxu0 0.0
        %1022 = vmatprep.subr.mxu0 0.0
        %1023 = vmatpush1.msra.mxu0 0.0
        %1024 = vmatprep.subr.mxu0 0.0
        %1025 = vmatpush1.msra.mxu0 0.0
        %1026 = vmatprep.subr.mxu0 0.0
        %1027 = vmatpush1.msra.mxu0 0.0
        %1028 = vmatprep.subr.mxu0 0.0
        %1029 = vmatpush1.msra.mxu0 0.0
        %1030 = vmatprep.subr.mxu0 0.0
        %1031 = vmatpush1.msra.mxu0 0.0
        %1032 = vmatprep.subr.mxu0 0.0
        %1033 = vmatpush1.msra.mxu0 0.0
        %1034 = vmatprep.subr.mxu0 0.0
        %1035 = vmatpush1.msra.mxu0 0.0
        %1036 = vmatprep.mubr.f32.mxu0 0.0
        %1037 = vmatmul.mubr.f32.gmra.mrb[0].mxu0 %v925
        %v1038 = vpop.f32.mrb[0].mxu0
        %v1039 = vadd.f32 0.0, %v1038
        %v1040 = vpop.f32.mrb[0].mxu0
        %1041 = vmatprep.mubr.f32.mxu0 0.0
        %1042 = vmatmul.mubr.f32.gmra.mrb[0].mxu0 %v928
        %v1043 = vpop.f32.mrb[0].mxu0
        %v1044 = vadd.f32 0.0, %v1043
        %v1045 = vpop.f32.mrb[0].mxu0
        %1046 = vmatprep.mubr.f32.mxu0 0.0
        %1047 = vmatmul.mubr.f32.gmra.mrb[0].mxu0 %v931
        %v1048 = vpop.f32.mrb[0].mxu0
        %v1049 = vadd.f32 0.0, %v1048
        %v1050 = vpop.f32.mrb[0].mxu0
        %1051 = vmatprep.mubr.f32.mxu0 0.0
        %1052 = vmatmul.mubr.f32.gmra.mrb[0].mxu0 %v934
        %v1053 = vpop.f32.mrb[0].mxu0
        %v1054 = vadd.f32 0.0, %v1053
        %v1055 = vpop.f32.mrb[0].mxu0
        %1056 = vmatprep.mubr.f32.mxu0 0.0
        %1057 = vmatmul.mubr.f32.gmra.mrb[0].mxu0 %v937
        %v1058 = vpop.f32.mrb[0].mxu0
        %v1059 = vadd.f32 0.0, %v1058
        %v1060 = vpop.f32.mrb[0].mxu0
        %1061 = vmatprep.mubr.f32.mxu0 0.0
        %1062 = vmatmul.mubr.f32.gmra.mrb[0].mxu0 %v940
        %v1063 = vpop.f32.mrb[0].mxu0
        %v1064 = vadd.f32 0.0, %v1063
        %v1065 = vpop.f32.mrb[0].mxu0
        %1066 = vmatprep.mubr.f32.mxu0 0.0
        %1067 = vmatmul.mubr.f32.gmra.mrb[0].mxu0 %v943
        %v1068 = vpop.f32.mrb[0].mxu0
        %v1069 = vadd.f32 0.0, %v1068
        %v1070 = vpop.f32.mrb[0].mxu0
        %1071 = vmatprep.mubr.f32.mxu0 0.0
        %1072 = vmatmul.mubr.f32.gmra.mrb[0].mxu0 %v946
        %v1073 = vpop.f32.mrb[0].mxu0
        %v1074 = vadd.f32 0.0, %v1073
        %v1075 = vpop.f32.mrb[0].mxu0
        %1076 = vmatprep.mubr.f32.mxu0 0.0
        %1077 = vmatmul.mubr.f32.gmra.mrb[0].mxu0 %v949
        %v1078 = vpop.f32.mrb[0].mxu0
        %v1079 = vadd.f32 0.0, %v1078
        %v1080 = vpop.f32.mrb[0].mxu0
        %1081 = vmatprep.mubr.f32.mxu0 0.0
        %1082 = vmatmul.mubr.f32.gmra.mrb[0].mxu0 %v952
        %v1083 = vpop.f32.mrb[0].mxu0
        %v1084 = vadd.f32 0.0, %v1083
        %v1085 = vpop.f32.mrb[0].mxu0
        %1086 = vmatprep.mubr.f32.mxu0 0.0
        %1087 = vmatmul.mubr.f32.gmra.mrb[0].mxu0 %v955
        %v1088 = vpop.f32.mrb[0].mxu0
        %v1089 = vadd.f32 0.0, %v1088
        %v1090 = vpop.f32.mrb[0].mxu0
        %1091 = vmatprep.mubr.f32.mxu0 0.0
        %1092 = vmatmul.mubr.f32.gmra.mrb[0].mxu0 %v958
        %v1093 = vpop.f32.mrb[0].mxu0
        %v1094 = vadd.f32 0.0, %v1093
        %v1095 = vpop.f32.mrb[0].mxu0
        %1096 = vmatprep.mubr.f32.mxu0 0.0
        %1097 = vmatmul.mubr.f32.gmra.mrb[0].mxu0 %v961
        %v1098 = vpop.f32.mrb[0].mxu0
        %v1099 = vadd.f32 0.0, %v1098
        %v1100 = vpop.f32.mrb[0].mxu0
        %1101 = vmatprep.mubr.f32.mxu0 0.0
        %1102 = vmatmul.mubr.f32.gmra.mrb[0].mxu0 %v964
        %v1103 = vpop.f32.mrb[0].mxu0
        %v1104 = vadd.f32 0.0, %v1103
        %v1105 = vpop.f32.mrb[0].mxu0
        %1106 = vmatprep.mubr.f32.mxu0 0.0
        %1107 = vmatmul.mubr.f32.gmra.mrb[0].mxu0 %v967
        %v1108 = vpop.f32.mrb[0].mxu0
        %v1109 = vadd.f32 0.0, %v1108
        %v1110 = vpop.f32.mrb[0].mxu0
        %1111 = vmatprep.mubr.f32.mxu0 0.0
        %1112 = vmatmul.mubr.f32.gmra.mrb[0].mxu0 %v970
        %v1113 = vpop.f32.mrb[0].mxu0
        %v1114 = vadd.f32 0.0, %v1113
        %v1115 = vpop.f32.mrb[0].mxu0
        %1116 = vdwg.mxu0
        %1117 = vxpose.xlu0.b32.start [1/16] %v1039, 128
        %1118 = vxpose.xlu0.b32.cont [2/16] %v1044, 128
        %1119 = vxpose.xlu0.b32.cont [3/16] %v1049, 128
        %1120 = vxpose.xlu0.b32.cont [4/16] %v1054, 128
        %1121 = vxpose.xlu0.b32.cont [5/16] %v1059, 128
        %1122 = vxpose.xlu0.b32.cont [6/16] %v1064, 128
        %1123 = vxpose.xlu0.b32.cont [7/16] %v1069, 128
        %1124 = vxpose.xlu0.b32.cont [8/16] %v1074, 128
        %1125 = vxpose.xlu0.b32.cont [9/16] %v1079, 128
        %1126 = vxpose.xlu0.b32.cont [10/16] %v1084, 128
        %1127 = vxpose.xlu0.b32.cont [11/16] %v1089, 128
        %1128 = vxpose.xlu0.b32.cont [12/16] %v1094, 128
        %1129 = vxpose.xlu0.b32.cont [13/16] %v1099, 128
        %1130 = vxpose.xlu0.b32.cont [14/16] %v1104, 128
        %1131 = vxpose.xlu0.b32.cont [15/16] %v1109, 128
        %1132 = vxpose.xlu0.b32.end [16/16] %v1114, 128
        %v1133 = vpop.trf.xlu0
        %v1134 = vpop.trf.xlu0
        %v1135 = vpop.trf.xlu0
        %v1136 = vpop.trf.xlu0
        %v1137 = vpop.trf.xlu0
        %v1138 = vpop.trf.xlu0
        %v1139 = vpop.trf.xlu0
        %v1140 = vpop.trf.xlu0
        %v1141 = vpop.trf.xlu0
        %v1142 = vpop.trf.xlu0
        %v1143 = vpop.trf.xlu0
        %v1144 = vpop.trf.xlu0
        %v1145 = vpop.trf.xlu0
        %v1146 = vpop.trf.xlu0
        %v1147 = vpop.trf.xlu0
        %v1148 = vpop.trf.xlu0
        %1149 = vst [vmem:[%s271] sm:$0x1] %v1133
        %s1150 = sand.u32 %s181, 1
        %s1151 = scalar_lea.sflag [#allocation3], %s1150
        %s1152 = sand.u32 %s181, 1
        %s1153 = scalar_lea.vmem [#allocation2], %s1152
        // Predicated region
        $region49: #{icm_forward.1} parent=47 // pred_check
          %p1154 = pneg %p191
        $region50: #{icm_forward.1} parent=47 // pred_check_branch
          %1156 = sbr.rel (%p1154) target = $region52
        $region51: #{icm_forward.1} parent=47 // pred_region
          %s1158 = ssub.s32 16, 16
          %1159 = vsyncadd %s1151, %s1158
          %s1160 = smul.addr %s21, 16
          %s1161 = scalar_lea.hbm %s7, %s1160
          %s1163 = sshll.u32 %s1153, 4
          %s1164 = int_to_ptr.vmem [resolvable:$true] %s1163
          %1166 = dma.vmem_to_hbm [thread:$0]  %s1164, 16, %s1161, %s1151
        $region52: #{icm_forward.1} parent=47 // pred_fallthru
          _
      $region48: #{icm_forward.1} parent=5 // pred_fallthru
        _
      %p1167 = scmp.le.s32.totalorder 2, %s16
      // Predicated region
      $region53: #{icm_forward.1} parent=5 // pred_check
        %p1168 = pneg %p1167
      $region54: #{icm_forward.1} parent=5 // pred_check_branch
        %1170 = sbr.rel (%p1168) target = $region56
      $region55: #{icm_forward.1} parent=5 // pred_region
        %s1171 = ssub.s32 %s16, 2
        // Predicated region
        $region57: #{icm_forward.1} parent=55 // pred_check
          %p1172 = pneg %p197
        $region58: #{icm_forward.1} parent=55 // pred_check_branch
          %1174 = sbr.rel (%p1172) target = $region60
        $region59: #{icm_forward.1} parent=55 // pred_region
          %s1175 = sand.u32 %s182, 1
          %s1176 = scalar_lea.sflag [#allocation3], %s1175
          %s1177 = sand.u32 %s182, 1
          %s1178 = scalar_lea.vmem [#allocation2], %s1177
          %1179 = dma.done %s1176, 16
        $region60: #{icm_forward.1} parent=55 // pred_fallthru
          _
      $region56: #{icm_forward.1} parent=5 // pred_fallthru
        _
    $region6: #{icm_forward.1} parent=1 // loop_footer
      %s20 = sadd.s32 1, %s16
    $region7: #{icm_forward.1} parent=1 // loop_footer_branch
      %15 = sbr.rel target = $region3
    $region8: #{icm_forward.1} parent=1 // loop_exit
      _
    %1180 = vsyncpa [#allocation3], 1
    %s1181 = scalar_lea.sflag [#allocation3], 1
    %1182 = vsyncpa %s1181, 1

</llo_original>
